<compile_context>
chip_gen: v5e
topology: v5e:2x2
jax: 0.10.0
libtpu: 0.0.40
codegen_flags: <defaults>
</compile_context>

<pallas_src>
import functools

import jax
import jax.numpy as jnp
from jax import lax
from jax.experimental import pallas as pl
from jax.experimental.pallas import tpu as pltpu


def _cdiv(a, b):
    return (a + b - 1) // b


def _round_up(x, m):
    return ((x + m - 1) // m) * m


def _ordinal_loss_kernel(pred_ref, tgt_ref, out_ref, acc_ref, *,
                         scale, hw, tile, tiles_per_chunk):
    # pred_ref: (N, C, TILE) f32/bf16   tgt_ref: (N, 1, TILE) i32
    # out_ref:  (1, 8, 128) f32         acc_ref: (C, TILE) f32 scratch (resident)
    c_idx = pl.program_id(0)
    t_idx = pl.program_id(1)

    @pl.when(t_idx == 0)
    def _():
        acc_ref[...] = jnp.zeros_like(acc_ref)

    p = pred_ref[...].astype(jnp.float32)             # (N, C, TILE)
    t = tgt_ref[...]                                  # (N, 1, TILE) int32
    n, c, _ = p.shape

    # Ordinal channel index; broadcasts over N and lanes in the compare.
    k = lax.broadcasted_iota(jnp.int32, (1, c, tile), 1)
    mask = k <= t                                     # (N, C, TILE)

    # Single transcendental per element.  pred is a softmax in [0, 1], so the
    # reference's upper clamp at 1e8 is a numerical no-op and is dropped.
    x = jnp.where(mask, p, 1.0 - p)
    contrib = jnp.log(jnp.maximum(x, 1e-8))           # (N, C, TILE)

    # Logical (unclamped) lane offset of this tile in the flattened H*W axis.
    start = (c_idx * tiles_per_chunk + t_idx) * tile

    @pl.when(start + tile <= hw)                      # common case: full tile
    def _():
        acc_ref[...] += jnp.sum(contrib, axis=0)

    @pl.when(start + tile > hw)                       # ragged / OOB tail tile
    def _():
        lane = lax.broadcasted_iota(jnp.int32, (n, c, tile), 2)
        valid = (start + lane) < hw
        acc_ref[...] += jnp.sum(jnp.where(valid, contrib, 0.0), axis=0)

    @pl.when(t_idx == pl.num_programs(1) - 1)
    def _():
        total = jnp.sum(acc_ref[...])                 # one cross-lane reduce
        out_ref[...] = jnp.full(out_ref.shape, total * scale,
                                dtype=out_ref.dtype)


def ordinal_loss(pred_softmax, target_labels, *, tile_hw=8192, num_chunks=None):
    """pred_softmax: (N, C, H, W) f32/bf16 softmax; target_labels: (N, 1, H, W) int."""
    N, C, H, W = pred_softmax.shape
    HW = H * W

    kind = ""
    try:
        kind = jax.devices()[0].device_kind.lower()
    except Exception:
        pass
    is_v7 = "v7" in kind

    if num_chunks is None:
        num_chunks = 2 if is_v7 else 1                # megacore split on v7x only
    num_chunks = max(1, int(num_chunks))

    pred = pred_softmax.reshape(N, C, HW)
    if pred.dtype not in (jnp.float32, jnp.bfloat16):
        pred = pred.astype(jnp.float32)
    tgt = target_labels.reshape(N, 1, HW)
    if tgt.dtype != jnp.int32:
        # TODO(synk): could keep int8/int16 targets in HBM; int32 keeps layout simple.
        tgt = tgt.astype(jnp.int32)

    pred_elt = 2 if pred.dtype == jnp.bfloat16 else 4
    # VMEM bytes per lane column: double-buffered pred + double-buffered tgt + acc.
    per_lane = 2 * N * C * pred_elt + 2 * N * 4 + C * 4
    vmem_budget = (40 << 20) if is_v7 else (80 << 20)
    tile_cap = max(128, (vmem_budget // per_lane) // 128 * 128)

    tile = min(tile_hw, tile_cap, _round_up(_cdiv(HW, num_chunks), 128))
    tile = max(128, (tile // 128) * 128)

    n_blocks = _cdiv(HW, tile)
    num_chunks = max(1, min(num_chunks, n_blocks))
    tiles_per_chunk = _cdiv(n_blocks, num_chunks)
    last_block = n_blocks - 1

    def hw_block(ci, ti):
        # Clamp so DMAs never start past the end of the array; the kernel
        # masks logically-out-of-range lanes to zero contribution.
        return jnp.minimum(ci * tiles_per_chunk + ti, last_block)

    scale = -1.0 / float(N * H * W)                   # multiply, not divide
    kernel = functools.partial(_ordinal_loss_kernel, scale=scale, hw=HW,
                               tile=tile, tiles_per_chunk=tiles_per_chunk)

    est_block_bytes = per_lane * tile + 4 * 8 * 128 * num_chunks
    vmem_cap = (48 << 20) if is_v7 else (96 << 20)
    vmem_limit = int(max(32 << 20, min(vmem_cap, 2 * est_block_bytes)))

    out = pl.pallas_call(
        kernel,
        out_shape=jax.ShapeDtypeStruct((num_chunks, 8, 128), jnp.float32),
        grid_spec=pltpu.PrefetchScalarGridSpec(
            num_scalar_prefetch=0,
            grid=(num_chunks, tiles_per_chunk),
            in_specs=[
                pl.BlockSpec((N, C, tile),
                             lambda ci, ti: (0, 0, hw_block(ci, ti))),
                pl.BlockSpec((N, 1, tile),
                             lambda ci, ti: (0, 0, hw_block(ci, ti))),
            ],
            out_specs=pl.BlockSpec((1, 8, 128), lambda ci, ti: (ci, 0, 0)),
            scratch_shapes=[pltpu.VMEM((C, tile), jnp.float32)],
        ),
        compiler_params=pltpu.CompilerParams(
            dimension_semantics=("parallel", "arbitrary"),
            vmem_limit_bytes=vmem_limit,
        ),
    )(pred, tgt)

    # Tiny epilogue in XLA: add the per-chunk partial sums (already scaled).
    return jnp.sum(out[:, 0, 0])


def _reference_loss(pred_softmax, target_labels):
    # Pure-JAX reference (mirrors the PyTorch code).
    N, C, H, W = pred_softmax.shape
    k = lax.broadcasted_iota(jnp.int32, (N, C, H, W), 1)
    mask = k <= target_labels
    log_p = jnp.log(jnp.clip(pred_softmax.astype(jnp.float32), 1e-8, 1e8))
    log_1mp = jnp.log(jnp.clip(1.0 - pred_softmax.astype(jnp.float32), 1e-8, 1e8))
    loss = jnp.sum(jnp.where(mask, log_p, log_1mp))
    return loss / (-(N * H * W))


if __name__ == "__main__":
    key = jax.random.PRNGKey(0)
    k1, k2 = jax.random.split(key)

    N, C, H, W = 2, 4, 16, 16
    logits = jax.random.normal(k1, (N, C, H, W), dtype=jnp.float32)
    pred_softmax = jax.nn.softmax(logits, axis=1)
    target_labels = jax.random.randint(k2, (N, 1, H, W), 0, C, dtype=jnp.int32)

    loss = ordinal_loss(pred_softmax, target_labels)
    loss = jax.block_until_ready(loss)

    ref = _reference_loss(pred_softmax, target_labels)
    assert jnp.allclose(loss, ref, rtol=1e-5, atol=1e-5), (loss, ref)

    print("KERNEL_OK")
</pallas_src>

<mosaic_0001>
module attributes {stable_mosaic.version = 11 : i64} {
  func.func @_ordinal_loss_kernel(%arg0: i32, %arg1: i32, %arg2: memref<2x4x256xf32, #tpu.memory_space<vmem>>, %arg3: memref<2x1x256xi32, #tpu.memory_space<vmem>>, %arg4: memref<1x8x128xf32, #tpu.memory_space<vmem>>, %arg5: memref<4x256xf32, #tpu.memory_space<vmem>>) attributes {dimension_semantics = [#tpu.dimension_semantics<parallel>, #tpu.dimension_semantics<arbitrary>], iteration_bounds = array<i64: 1, 1>, scalar_prefetch = 0 : i64, scratch_operands = 1 : i64, tpu.core_type = #tpu.core_type<tc>, window_params = [{transform_indices = @transform_0, window_bounds = array<i64: 2, 4, 256>}, {transform_indices = @transform_1, window_bounds = array<i64: 2, 1, 256>}, {transform_indices = @transform_2, window_bounds = array<i64: 1, 8, 128>}]} {
    %c0_i32 = arith.constant 0 : i32
    %0 = arith.cmpi eq, %arg1, %c0_i32 : i32
    %1 = arith.extui %0 : i1 to i32
    %c0_i32_0 = arith.constant 0 : i32
    %2 = arith.cmpi ne, %1, %c0_i32_0 : i32
    scf.if %2 {
      %cst_15 = arith.constant 0.000000e+00 : f32
      %29 = vector.broadcast %cst_15 : f32 to vector<4x256xf32>
      %c0_16 = arith.constant 0 : index
      %c0_17 = arith.constant 0 : index
      %30 = vector.load %arg5[%c0_16, %c0_17] : memref<4x256xf32, #tpu.memory_space<vmem>>, vector<4x256xf32>
      tpu.vector_store %arg5[%c0_16, %c0_17], %29 {strides = array<i32>} : memref<4x256xf32, #tpu.memory_space<vmem>>, vector<4x256xf32>,
    } else {
    }
    %c0 = arith.constant 0 : index
    %c0_1 = arith.constant 0 : index
    %c0_2 = arith.constant 0 : index
    %3 = vector.load %arg2[%c0, %c0_1, %c0_2] : memref<2x4x256xf32, #tpu.memory_space<vmem>>, vector<2x4x256xf32>
    %c0_3 = arith.constant 0 : index
    %c0_4 = arith.constant 0 : index
    %c0_5 = arith.constant 0 : index
    %4 = vector.load %arg3[%c0_3, %c0_4, %c0_5] : memref<2x1x256xi32, #tpu.memory_space<vmem>>, vector<2x1x256xi32>
    %5 = tpu.iota {dimensions = array<i32: 1>} : vector<1x4x256xi32>
    %6 = vector.broadcast %5 : vector<1x4x256xi32> to vector<2x4x256xi32>
    %7 = vector.broadcast %4 : vector<2x1x256xi32> to vector<2x4x256xi32>
    %8 = arith.cmpi sle, %6, %7 : vector<2x4x256xi32>
    %cst = arith.constant 1.000000e+00 : f32
    %9 = vector.broadcast %cst : f32 to vector<2x4x256xf32>
    %10 = arith.subf %9, %3 : vector<2x4x256xf32>
    %11 = arith.select %8, %3, %10 : vector<2x4x256xi1>, vector<2x4x256xf32>
    %cst_6 = arith.constant 9.99999993E-9 : f32
    %12 = vector.broadcast %cst_6 : f32 to vector<2x4x256xf32>
    %13 = arith.maximumf %11, %12 : vector<2x4x256xf32>
    %14 = math.log %13 : vector<2x4x256xf32>
    %c1_i32 = arith.constant 1 : i32
    %15 = arith.muli %arg0, %c1_i32 : i32
    %16 = arith.addi %15, %arg1 : i32
    %c256_i32 = arith.constant 256 : i32
    %17 = arith.muli %16, %c256_i32 : i32
    %c256_i32_7 = arith.constant 256 : i32
    %18 = arith.addi %17, %c256_i32_7 : i32
    %c256_i32_8 = arith.constant 256 : i32
    %19 = arith.cmpi sle, %18, %c256_i32_8 : i32
    %20 = arith.extui %19 : i1 to i32
    %c0_i32_9 = arith.constant 0 : i32
    %21 = arith.cmpi ne, %20, %c0_i32_9 : i32
    scf.if %21 {
      %c0_15 = arith.constant 0 : index
      %c0_16 = arith.constant 0 : index
      %29 = vector.load %arg5[%c0_15, %c0_16] : memref<4x256xf32, #tpu.memory_space<vmem>>, vector<4x256xf32>
      %cst_17 = arith.constant dense<0.000000e+00> : vector<4x256xf32>
      %30 = vector.multi_reduction <add>, %14, %cst_17 [0] : vector<2x4x256xf32> to vector<4x256xf32>
      %31 = arith.addf %29, %30 : vector<4x256xf32>
      %c0_18 = arith.constant 0 : index
      %c0_19 = arith.constant 0 : index
      %32 = vector.load %arg5[%c0_18, %c0_19] : memref<4x256xf32, #tpu.memory_space<vmem>>, vector<4x256xf32>
      tpu.vector_store %arg5[%c0_18, %c0_19], %31 {strides = array<i32>} : memref<4x256xf32, #tpu.memory_space<vmem>>, vector<4x256xf32>,
    } else {
    }
    %c256_i32_10 = arith.constant 256 : i32
    %22 = arith.addi %17, %c256_i32_10 : i32
    %c256_i32_11 = arith.constant 256 : i32
    %23 = arith.cmpi sgt, %22, %c256_i32_11 : i32
    %24 = arith.extui %23 : i1 to i32
    %c0_i32_12 = arith.constant 0 : i32
    %25 = arith.cmpi ne, %24, %c0_i32_12 : i32
    scf.if %25 {
      %29 = tpu.iota {dimensions = array<i32: 2>} : vector<2x4x256xi32>
      %30 = vector.broadcast %17 : i32 to vector<2x4x256xi32>
      %31 = arith.addi %30, %29 : vector<2x4x256xi32>
      %c256_i32_15 = arith.constant 256 : i32
      %32 = vector.broadcast %c256_i32_15 : i32 to vector<2x4x256xi32>
      %33 = arith.cmpi slt, %31, %32 : vector<2x4x256xi32>
      %c0_16 = arith.constant 0 : index
      %c0_17 = arith.constant 0 : index
      %34 = vector.load %arg5[%c0_16, %c0_17] : memref<4x256xf32, #tpu.memory_space<vmem>>, vector<4x256xf32>
      %cst_18 = arith.constant 0.000000e+00 : f32
      %35 = vector.broadcast %cst_18 : f32 to vector<2x4x256xf32>
      %36 = arith.select %33, %14, %35 : vector<2x4x256xi1>, vector<2x4x256xf32>
      %cst_19 = arith.constant dense<0.000000e+00> : vector<4x256xf32>
      %37 = vector.multi_reduction <add>, %36, %cst_19 [0] : vector<2x4x256xf32> to vector<4x256xf32>
      %38 = arith.addf %34, %37 : vector<4x256xf32>
      %c0_20 = arith.constant 0 : index
      %c0_21 = arith.constant 0 : index
      %39 = vector.load %arg5[%c0_20, %c0_21] : memref<4x256xf32, #tpu.memory_space<vmem>>, vector<4x256xf32>
      tpu.vector_store %arg5[%c0_20, %c0_21], %38 {strides = array<i32>} : memref<4x256xf32, #tpu.memory_space<vmem>>, vector<4x256xf32>,
    } else {
    }
    %c0_i32_13 = arith.constant 0 : i32
    %26 = arith.cmpi eq, %arg1, %c0_i32_13 : i32
    %27 = arith.extui %26 : i1 to i32
    %c0_i32_14 = arith.constant 0 : i32
    %28 = arith.cmpi ne, %27, %c0_i32_14 : i32
    scf.if %28 {
      %c0_15 = arith.constant 0 : index
      %c0_16 = arith.constant 0 : index
      %29 = vector.load %arg5[%c0_15, %c0_16] : memref<4x256xf32, #tpu.memory_space<vmem>>, vector<4x256xf32>
      %30 = vector.shape_cast %29 : vector<4x256xf32> to vector<1x4x256xf32>
      %cst_17 = arith.constant dense<0.000000e+00> : vector<1xf32>
      %31 = vector.multi_reduction <add>, %30, %cst_17 [1, 2] : vector<1x4x256xf32> to vector<1xf32>
      %32 = vector.shape_cast %31 : vector<1xf32> to vector<1x1x1xf32>
      %33 = vector.extract %32[0, 0, 0] : f32 from vector<1x1x1xf32>
      %cst_18 = arith.constant -0.001953125 : f32
      %34 = arith.mulf %33, %cst_18 : f32
      %35 = vector.broadcast %34 : f32 to vector<1x8x128xf32>
      %c0_19 = arith.constant 0 : index
      %c0_20 = arith.constant 0 : index
      %c0_21 = arith.constant 0 : index
      %36 = vector.load %arg4[%c0_19, %c0_20, %c0_21] : memref<1x8x128xf32, #tpu.memory_space<vmem>>, vector<1x8x128xf32>
      tpu.vector_store %arg4[%c0_19, %c0_20, %c0_21], %35 {strides = array<i32>} : memref<1x8x128xf32, #tpu.memory_space<vmem>>, vector<1x8x128xf32>,
    } else {
    }
    return
  }
  func.func @transform_0(%arg0: i32, %arg1: i32) -> (i32, i32, i32) {
    %c1_i32 = arith.constant 1 : i32
    %0 = arith.muli %arg0, %c1_i32 : i32
    %1 = arith.addi %0, %arg1 : i32
    %c0_i32 = arith.constant 0 : i32
    %2 = arith.minsi %1, %c0_i32 : i32
    %c0_i32_0 = arith.constant 0 : i32
    %c0_i32_1 = arith.constant 0 : i32
    %c0_i32_2 = arith.constant 0 : i32
    return %c0_i32_0, %c0_i32_1, %2 : i32, i32, i32
  }
  func.func @transform_1(%arg0: i32, %arg1: i32) -> (i32, i32, i32) {
    %c1_i32 = arith.constant 1 : i32
    %0 = arith.muli %arg0, %c1_i32 : i32
    %1 = arith.addi %0, %arg1 : i32
    %c0_i32 = arith.constant 0 : i32
    %2 = arith.minsi %1, %c0_i32 : i32
    %c0_i32_0 = arith.constant 0 : i32
    %c0_i32_1 = arith.constant 0 : i32
    %c0_i32_2 = arith.constant 0 : i32
    return %c0_i32_0, %c0_i32_1, %2 : i32, i32, i32
  }
  func.func @transform_2(%arg0: i32, %arg1: i32) -> (i32, i32, i32) {
    %c0_i32 = arith.constant 0 : i32
    %c0_i32_0 = arith.constant 0 : i32
    %c0_i32_1 = arith.constant 0 : i32
    return %arg0, %c0_i32, %c0_i32_0 : i32, i32, i32
  }
}

</mosaic_0001>

<llo_original>
// kernel: tpu_custom_call.1
$region0: #{tpu_custom_call.1}
  #allocation0 [shape = 'u32[]', space=smem, size = 0x4, offset = 0x4, fixed_abs, tag = 'smem constant byte address 0x4 - core index']
  #allocation1 [shape = 'u32[72,128]{1,0:T(1,128)}', space=vmem, size = 0x9000, scoped, tag = 'internal scratch']
  #allocation2 [shape = 'f32[4,256]{1,0:T(4,128)}', space=vmem, size = 0x1000, scoped, tag = 'scratch operand']
  %s0 = inlined_call_operand.hbm [shape: f32[2,4,256], index: 0, kind: input, shape index: {}]
  %s1 = inlined_call_operand.hbm [shape: s32[2,1,256], index: 1, kind: input, shape index: {}]
  %s2 = inlined_call_operand.hbm [shape: f32[1,8,128], index: 2, kind: output, shape index: {}]
  %s3 = sld [smem:[#allocation0]]
  $region42: #{tpu_custom_call.1} parent=0
    _
  %s5 = ssub.s32 1, %s3
  %s6 = scalar_select 0, %s5, %s3
  $region1: #{tpu_custom_call.1} parent=0
    #allocation3 [shape = 'u8[8192]{0}', space=vmem, size = 0x2000, scoped, tag = 'input window, operand 0, single buffered']
    #allocation4 [shape = 's32[1]{0}', space=sflag, size = 0x4, scoped, tag = 'scoped memory for tpu_custom_call.1']
    #allocation5 [shape = 's32[1]{0}', space=sflag, size = 0x4, scoped, tag = 'scoped memory for tpu_custom_call.1']
    #allocation6 [shape = 'u8[2048]{0}', space=vmem, size = 0x800, scoped, tag = 'input window, operand 1, single buffered']
    #allocation7 [shape = 's32[1]{0}', space=sflag, size = 0x4, scoped, tag = 'scoped memory for tpu_custom_call.1']
    #allocation8 [shape = 'u8[4096]{0}', space=vmem, size = 0x1000, scoped, tag = 'output window, operand 0, single buffered']
    %7 = vsyncpa [#allocation4], 0
    %8 = vsyncpa [#allocation7], 0
    %9 = vsyncpa [#allocation5], 0
    // Predicated region
    $region2: #{tpu_custom_call.1} parent=1 // pred_check
      _
    $region3: #{tpu_custom_call.1} parent=1 // pred_check_branch
      %11 = sbr.rel (0) target = $region5
    $region4: #{tpu_custom_call.1} parent=1 // pred_region
      %s12 = sadd.s32 0, 0
      %p13 = scmp.lt.s32.totalorder %s12, 0
      %s14 = scalar_select %p13, %s12, 0
      %s15 = smul.u32 2, %s14
      %17 = vsyncadd [#allocation4], 0
      %s18 = smul.addr %s15, 4
      %s19 = scalar_lea.hbm %s0, %s18
      %s20 = sshll.u32 %s19, 4
      %s21 = int_to_ptr.hbm [resolvable:$true] %s20
      %s22 = sshll.u32 [#allocation3], 4
      %s23 = int_to_ptr.vmem [resolvable:$true] %s22
      %28 = dma.hbm_to_vmem [thread:$0]  %s21, 256, %s23, [#allocation4], 128, 128, 8
    $region5: #{tpu_custom_call.1} parent=1 // pred_fallthru
      _
    // Predicated region
    $region6: #{tpu_custom_call.1} parent=1 // pred_check
      _
    $region7: #{tpu_custom_call.1} parent=1 // pred_check_branch
      %30 = sbr.rel (0) target = $region9
    $region8: #{tpu_custom_call.1} parent=1 // pred_region
      %s31 = sadd.s32 0, 0
      %p32 = scmp.lt.s32.totalorder %s31, 0
      %s33 = scalar_select %p32, %s31, 0
      %s34 = smul.u32 2, %s33
      %36 = vsyncadd [#allocation7], 0
      %s37 = scalar_lea.hbm %s1, %s34
      %s38 = sshll.u32 %s37, 4
      %s39 = int_to_ptr.hbm [resolvable:$true] %s38
      %s40 = sshll.u32 [#allocation6], 4
      %s41 = int_to_ptr.vmem [resolvable:$true] %s40
      %46 = dma.hbm_to_vmem [thread:$0]  %s39, 64, %s41, [#allocation7], 32, 32, 2
    $region9: #{tpu_custom_call.1} parent=1 // pred_fallthru
      _
    // Predicated region
    $region10: #{tpu_custom_call.1} parent=1 // pred_check
      _
    $region11: #{tpu_custom_call.1} parent=1 // pred_check_branch
      %48 = sbr.rel (0) target = $region13
    $region12: #{tpu_custom_call.1} parent=1 // pred_region
      %50 = dma.done [#allocation4], 256
    $region13: #{tpu_custom_call.1} parent=1 // pred_fallthru
      _
    // Predicated region
    $region14: #{tpu_custom_call.1} parent=1 // pred_check
      _
    $region15: #{tpu_custom_call.1} parent=1 // pred_check_branch
      %52 = sbr.rel (0) target = $region17
    $region16: #{tpu_custom_call.1} parent=1 // pred_region
      %54 = dma.done [#allocation7], 64
    $region17: #{tpu_custom_call.1} parent=1 // pred_fallthru
      _
    %s55 = sadd.s32 0, 0
    %p56 = scmp.lt.s32.totalorder %s55, 0
    %s57 = scalar_select %p56, %s55, 0
    %s58 = smul.u32 2, %s57
    %s59 = sadd.s32 0, 0
    %p60 = scmp.lt.s32.totalorder %s59, 0
    %s61 = scalar_select %p60, %s59, 0
    %s62 = smul.u32 2, %s61
    %p63 = scmp.eq.s32.totalorder 0, 0
    // Predicated region
    $region18: #{tpu_custom_call.1} parent=1 // pred_check
      %p64 = pneg %p63
    $region19: #{tpu_custom_call.1} parent=1 // pred_check_branch
      %66 = sbr.rel (%p64) target = $region21
    $region20: #{tpu_custom_call.1} parent=1 // pred_region
      %67 = vst [vmem:[#allocation2] sm:$0xff] 0.0
    $region21: #{tpu_custom_call.1} parent=1 // pred_fallthru
      _
    %v68 = vld [vmem:[#allocation3] sm:$0xff]
    %v69 = vld [vmem:[#allocation3 + $0x8] sm:$0xff]
    %v70 = vld [vmem:[#allocation6] sm:$0x3]
    %v71 = vld [vmem:[#allocation6 + $0x2] sm:$0x3]
    %v72 = vlaneseq
    %v73 = vshrl.u32 %v72, 7
    %v74 = vperm.slane %v70, 0
    %v75 = vperm.slane %v70, 1
    %v76 = vperm.slane %v71, 0
    %v77 = vperm.slane %v71, 1
    %vm78 = vcmp.le.s32.totalorder %v73, %v74
    %vm79 = vcmp.le.s32.totalorder %v73, %v75
    %vm80 = vcmp.le.s32.totalorder %v73, %v76
    %vm81 = vcmp.le.s32.totalorder %v73, %v77
    %v82 = vsub.f32 1.0, %v68
    %v83 = vsub.f32 1.0, %v69
    %86 = vst [vmem:[#allocation1] ss:$2 sm:$0xff] %v68
    %v87 = vld.sshfl [vmem:[#allocation1] sm:$0xff pattern:$0x75316420]
    %v88 = vld.sshfl [vmem:[#allocation1 + $0x8] sm:$0xff pattern:$0x75316420]
    %s89 = scalar_lea.vmem [#allocation1], 16
    %90 = vst [vmem:[%s89] ss:$2 sm:$0xff] %v69
    %v91 = vld.sshfl [vmem:[#allocation1 + $0x10] sm:$0xff pattern:$0x75316420]
    %v92 = vld.sshfl [vmem:[#allocation1 + $0x18] sm:$0xff pattern:$0x75316420]
    %99 = vst [vmem:[#allocation1] ss:$2 sm:$0xff] %v82
    %v100 = vld.sshfl [vmem:[#allocation1] sm:$0xff pattern:$0x75316420]
    %v101 = vld.sshfl [vmem:[#allocation1 + $0x8] sm:$0xff pattern:$0x75316420]
    %s102 = scalar_lea.vmem [#allocation1], 16
    %103 = vst [vmem:[%s102] ss:$2 sm:$0xff] %v83
    %v104 = vld.sshfl [vmem:[#allocation1 + $0x10] sm:$0xff pattern:$0x75316420]
    %v105 = vld.sshfl [vmem:[#allocation1 + $0x18] sm:$0xff pattern:$0x75316420]
    %v110 = vsel %vm78, %v87, %v100
    %v111 = vsel %vm79, %v88, %v101
    %v112 = vsel %vm80, %v91, %v104
    %v113 = vsel %vm81, %v92, %v105
    %v114 = vmax.f32 %v110, 1e-08
    %v115 = vmax.f32 %v111, 1e-08
    %v116 = vmax.f32 %v112, 1e-08
    %v117 = vmax.f32 %v113, 1e-08
    %v118 = vlog2.pop %v114
    %v119 = vmul.f32 %v118, 0.6931472
    %v120 = vlog2.pop %v115
    %v121 = vmul.f32 %v120, 0.6931472
    %v122 = vlog2.pop %v116
    %v123 = vmul.f32 %v122, 0.6931472
    %v124 = vlog2.pop %v117
    %v125 = vmul.f32 %v124, 0.6931472
    %s126 = sadd.s32 0, 0
    %s127 = smul.u32 %s126, 256
    %s128 = sadd.s32 %s127, 256
    %p129 = scmp.le.s32.totalorder %s128, 256
    // Predicated region
    $region22: #{tpu_custom_call.1} parent=1 // pred_check
      %p130 = pneg %p129
    $region23: #{tpu_custom_call.1} parent=1 // pred_check_branch
      %132 = sbr.rel (%p130) target = $region25
    $region24: #{tpu_custom_call.1} parent=1 // pred_region
      %v133 = vld [vmem:[#allocation2] sm:$0xff]
      %vm134 = vcmask 1043456
      %v135 = vsel %vm134, %v119, 0.0
      %v136 = vsel %vm134, %v123, 0.0
      %v137 = vadd.f32 %v135, %v136
      %v138 = vsel %vm134, %v121, 0.0
      %v139 = vsel %vm134, %v125, 0.0
      %v140 = vadd.f32 %v138, %v139
      %v143 = vrot.slane %v140, 4
      %v144 = vsel %vm134, %v137, %v143
      %v146 = vadd.f32 %v133, %v144
      %147 = vst [vmem:[#allocation2] sm:$0xff] %v146
    $region25: #{tpu_custom_call.1} parent=1 // pred_fallthru
      _
    %p148 = scmp.gt.s32.totalorder %s128, 256
    // Predicated region
    $region26: #{tpu_custom_call.1} parent=1 // pred_check
      %p149 = pneg %p148
    $region27: #{tpu_custom_call.1} parent=1 // pred_check_branch
      %151 = sbr.rel (%p149) target = $region29
    $region28: #{tpu_custom_call.1} parent=1 // pred_region
      %v152 = vlaneseq
      %v153 = vand.u32 %v152, 127
      %v154 = vadd.s32 %v153, 128
      %v155 = vstv %s127
      %v156 = vadd.s32 %v155, %v153
      %v157 = vadd.s32 %v155, %v154
      %vm158 = vcmp.lt.s32.totalorder %v156, 256
      %vm159 = vcmp.lt.s32.totalorder %v157, 256
      %v160 = vld [vmem:[#allocation2] sm:$0xff]
      %v161 = vsel %vm158, %v119, 0.0
      %v162 = vsel %vm159, %v121, 0.0
      %v163 = vsel %vm158, %v123, 0.0
      %v164 = vsel %vm159, %v125, 0.0
      %vm165 = vcmask 1043456
      %v166 = vsel %vm165, %v161, 0.0
      %v167 = vsel %vm165, %v163, 0.0
      %v168 = vadd.f32 %v166, %v167
      %v169 = vsel %vm165, %v162, 0.0
      %v170 = vsel %vm165, %v164, 0.0
      %v171 = vadd.f32 %v169, %v170
      %v174 = vrot.slane %v171, 4
      %v175 = vsel %vm165, %v168, %v174
      %v177 = vadd.f32 %v160, %v175
      %178 = vst [vmem:[#allocation2] sm:$0xff] %v177
    $region29: #{tpu_custom_call.1} parent=1 // pred_fallthru
      _
    // Predicated region
    $region30: #{tpu_custom_call.1} parent=1 // pred_check
      %p179 = pneg %p63
    $region31: #{tpu_custom_call.1} parent=1 // pred_check_branch
      %181 = sbr.rel (%p179) target = $region33
    $region32: #{tpu_custom_call.1} parent=1 // pred_region
      %v182 = vld [vmem:[#allocation2] sm:$0xff]
      %184 = vst [vmem:[#allocation1] ss:$2 sm:$0xff] %v182
      %v185 = vld.sshfl [vmem:[#allocation1] sm:$0xff pattern:$0x75316420]
      %v186 = vld.sshfl [vmem:[#allocation1 + $0x8] sm:$0xff pattern:$0x75316420]
      %vm189 = vcmask 1043456
      %v190 = vsel %vm189, %v185, 0.0
      %v191 = vsel %vm189, %v186, 0.0
      %v192 = vadd.f32 %v190, %v191
      %193 = vadd.xlane.f32.xlu0 %v192
      %v194 = vpop.xlane.xlu0 %193
      %v195 = vrot.slane %v194, 4
      %v196 = vadd.f32 %v194, %v195
      %v197 = vrot.slane %v196, 2
      %v198 = vadd.f32 %v196, %v197
      %v199 = vrot.slane %v198, 1
      %v200 = vadd.f32 %v198, %v199
      %s201 = vtos %v200
      %s202 = smul.f32 %s201, -0.001953125
      %v203 = vstv %s202
      %204 = vst [vmem:[#allocation8] sm:$0xff] %v203
    $region33: #{tpu_custom_call.1} parent=1 // pred_fallthru
      _
    // Predicated region
    $region34: #{tpu_custom_call.1} parent=1 // pred_check
      _
    $region35: #{tpu_custom_call.1} parent=1 // pred_check_branch
      %206 = sbr.rel (0) target = $region37
    $region36: #{tpu_custom_call.1} parent=1 // pred_region
      %208 = vsyncadd [#allocation5], 0
      %s210 = sshll.u32 [#allocation8], 4
      %s211 = int_to_ptr.vmem [resolvable:$true] %s210
      %s212 = sshll.u32 %s2, 4
      %s213 = int_to_ptr.hbm [resolvable:$true] %s212
      %215 = dma.vmem_to_hbm [thread:$0]  %s211, 128, %s213, [#allocation5]
    $region37: #{tpu_custom_call.1} parent=1 // pred_fallthru
      _
    // Predicated region
    $region38: #{tpu_custom_call.1} parent=1 // pred_check
      _
    $region39: #{tpu_custom_call.1} parent=1 // pred_check_branch
      %217 = sbr.rel (0) target = $region41
    $region40: #{tpu_custom_call.1} parent=1 // pred_region
      %219 = dma.done [#allocation5], 128
    $region41: #{tpu_custom_call.1} parent=1 // pred_fallthru
      _
    %220 = vsyncpa [#allocation4], 1
    %221 = vsyncpa [#allocation7], 1
    %222 = vsyncpa [#allocation5], 1

</llo_original>
